<compile_context>
chip_gen: v7x
topology: tpu7x:2x2x1
jax: 0.10.0
libtpu: 0.0.40
codegen_flags: <defaults>
</compile_context>

<pallas_src>
from typing import NamedTuple

import jax
import jax.numpy as jnp
from jax.experimental import pallas as pl
from jax.experimental.pallas import tpu as pltpu


def _round_up(x, m):
    return (x + m - 1) // m * m


class PIWeights(NamedTuple):
    """Weights prepared once at parameter-init time (hoisted out of forward)."""
    wt: jax.Array        # padded W^T, shape (Ip, Op), compute dtype
    out_features: int    # O
    in_features: int     # I
    tn: int              # output tile width for the streaming path
    tk: int              # reduction tile depth for the streaming path
    resident: bool       # True -> whole W^T kept VMEM-resident, no K grid axis


def prepare_pi_weights(weights, *, compute_dtype=jnp.bfloat16, tn=1024, tk=512,
                       resident_byte_budget=8 * 1024 * 1024):
    """One-time layout work: transpose, pad, down-cast W. Call at parameter init.

    Doing this per forward costs 1-2 extra full HBM passes over W; hoisting it is
    a straight bandwidth win on every call.  |W|^T == |W^T|, so the kernel never
    transposes a tile and the output dim O lands on the lane axis (lane-dense
    stores).  Zero padding is safe: abs(0) = 0 contributes nothing to the dot.
    """
    O, I = weights.shape
    wt = weights.T.astype(compute_dtype)                     # (I, O)
    itemsize = jnp.dtype(compute_dtype).itemsize

    Ip_min, Op_min = _round_up(I, 128), _round_up(O, 128)
    resident = Ip_min * Op_min * itemsize <= resident_byte_budget

    if resident:
        tk, tn = Ip_min, Op_min                              # full extents
    else:
        tn = min(tn, Op_min)
        tk = min(tk, Ip_min)

    Ip, Op = _round_up(I, tk), _round_up(O, tn)
    if (Ip, Op) != (I, O):
        wt = jnp.pad(wt, ((0, Ip - I), (0, Op - O)))
    return PIWeights(wt=wt, out_features=O, in_features=I, tn=tn, tk=tk,
                     resident=resident)


def _pi_resident_kernel(x_ref, wt_ref, o_ref):
    """W^T fully VMEM-resident (constant block index -> DMA'd once); stream x."""
    # abs() on the VPU is hidden under the MXU.  (On v5e a sign-bit mask via
    # pltpu.bitcast would avoid bf16 VALU limits if profiles show cast chains.)
    w = jnp.abs(wt_ref[...])
    o_ref[...] = jnp.dot(x_ref[...], w,
                         preferred_element_type=jnp.float32).astype(o_ref.dtype)


def _pi_tiled_kernel(x_ref, wt_ref, o_ref, acc_ref):
    """One (tm, tn) output tile; accumulates over the K grid axis (axis 2)."""
    k = pl.program_id(2)
    partial = jnp.dot(x_ref[...], jnp.abs(wt_ref[...]),
                      preferred_element_type=jnp.float32)

    @pl.when(k == 0)
    def _():
        acc_ref[...] = partial           # direct write: no zero-init store+reload

    @pl.when(k > 0)
    def _():
        acc_ref[...] += partial

    @pl.when(k == pl.num_programs(2) - 1)
    def _():
        o_ref[...] = acc_ref[...].astype(o_ref.dtype)


def fully_connected_pi_layer(x, pw: PIWeights, *, tm=512, out_dtype=None):
    """y = x @ abs(W)^T  (== torch.nn.functional.linear(x, |W|, bias=None)).

    x:  [batch, input_size]; pw: prepared weights (see prepare_pi_weights).
    Returns [batch, output_size] in out_dtype (defaults to x.dtype).
    """
    B, I = x.shape
    assert I == pw.in_features, "input_size mismatch"
    O = pw.out_features
    Ip, Op = pw.wt.shape
    compute_dtype = pw.wt.dtype
    out_dtype = out_dtype or x.dtype

    # Batch tile: respect the (8,128) rule; when batch is big enough keep >=2
    # batch blocks so v7x megacore can shard the outer parallel axis.
    tm = min(tm, _round_up(B, 8))
    if B >= 16 and _round_up(B, 8) <= tm:
        tm = min(tm, _round_up(-(-B // 2), 8))
    Bp = _round_up(B, tm)

    # Pre-cast activations so HBM->VMEM DMA is actually in compute_dtype; pad
    # only if shapes require it (avoid a needless extra HBM copy of x).
    x_p = x.astype(compute_dtype) if x.dtype != compute_dtype else x
    if (Bp, Ip) != (B, I):
        x_p = jnp.pad(x_p, ((0, Bp - B), (0, Ip - I)))

    cs = jnp.dtype(compute_dtype).itemsize
    osz = jnp.dtype(out_dtype).itemsize
    cost = pl.CostEstimate(
        flops=2 * Bp * Op * Ip,
        transcendentals=0,
        bytes_accessed=Bp * Ip * cs + Ip * Op * cs + Bp * Op * osz,
    )

    if pw.resident:
        # Buffer budget: double-buffered x/out tiles + (conservatively) 2x W.
        need = 2 * tm * Ip * cs + 2 * Ip * Op * cs + 2 * tm * Op * osz
        vmem_limit = int(min(64 * 2**20, max(32 * 2**20, need * 5 // 4)))
        out = pl.pallas_call(
            _pi_resident_kernel,
            out_shape=jax.ShapeDtypeStruct((Bp, Op), out_dtype),
            grid_spec=pltpu.PrefetchScalarGridSpec(
                num_scalar_prefetch=0,
                grid=(Bp // tm,),
                in_specs=[
                    pl.BlockSpec((tm, Ip), lambda i: (i, 0)),   # x tile streamed
                    pl.BlockSpec((Ip, Op), lambda i: (0, 0)),   # W^T resident
                ],
                out_specs=pl.BlockSpec((tm, Op), lambda i: (i, 0)),
            ),
            compiler_params=pltpu.CompilerParams(
                dimension_semantics=("parallel",),
                vmem_limit_bytes=vmem_limit,
            ),
            cost_estimate=cost,
        )(x_p, pw.wt)
    else:
        tn, tk = pw.tn, pw.tk
        need = (2 * tm * tk * cs + 2 * tk * tn * cs
                + 2 * tm * tn * osz + tm * tn * 4)
        vmem_limit = int(min(64 * 2**20, max(32 * 2**20, need * 5 // 4)))
        out = pl.pallas_call(
            _pi_tiled_kernel,
            out_shape=jax.ShapeDtypeStruct((Bp, Op), out_dtype),
            grid_spec=pltpu.PrefetchScalarGridSpec(
                num_scalar_prefetch=0,
                grid=(Bp // tm, Op // tn, Ip // tk),
                in_specs=[
                    pl.BlockSpec((tm, tk), lambda i, j, k: (i, k)),  # x tile
                    pl.BlockSpec((tk, tn), lambda i, j, k: (k, j)),  # |W^T| tile
                ],
                out_specs=pl.BlockSpec((tm, tn), lambda i, j, k: (i, j)),
                scratch_shapes=[pltpu.VMEM((tm, tn), jnp.float32)],  # f32 acc
            ),
            compiler_params=pltpu.CompilerParams(
                dimension_semantics=("parallel", "parallel", "arbitrary"),
                vmem_limit_bytes=vmem_limit,
            ),
            cost_estimate=cost,
        )(x_p, pw.wt)

    return out[:B, :O]


if __name__ == "__main__":
    # Small shapes consistent with the module: batch=8, input_size=32, output_size=16.
    batch, input_size, output_size = 8, 32, 16

    key = jax.random.PRNGKey(0)
    k_x, k_w = jax.random.split(key)
    x = jax.random.normal(k_x, (batch, input_size), dtype=jnp.float32)
    # Deterministic "randn" init, mirroring nn.Parameter(torch.randn(O, I)).
    weights = jax.random.normal(k_w, (output_size, input_size), dtype=jnp.float32)

    # Pure-JAX reference.
    y_ref = x @ jnp.abs(weights).T

    # Production fast path: bf16 operands (pre-cast once), f32 accumulation,
    # W-resident kernel (tiny W fits VMEM easily).
    pw_bf16 = prepare_pi_weights(weights)
    y_bf16 = fully_connected_pi_layer(x, pw_bf16)
    jax.block_until_ready(y_bf16)
    assert y_bf16.shape == (batch, output_size)
    assert jnp.allclose(y_bf16, y_ref, atol=5e-2, rtol=2e-2), "bf16 mismatch vs reference"

    # Exact f32 path (same kernels, f32 operands).
    pw_f32 = prepare_pi_weights(weights, compute_dtype=jnp.float32)
    y_f32 = fully_connected_pi_layer(x, pw_f32)
    jax.block_until_ready(y_f32)
    assert jnp.allclose(y_f32, y_ref, atol=1e-5, rtol=1e-5), "f32 mismatch vs reference"

    # Also exercise the streaming/tiled path (forced by a zero resident budget).
    pw_tiled = prepare_pi_weights(weights, compute_dtype=jnp.float32,
                                  resident_byte_budget=0)
    y_tiled = fully_connected_pi_layer(x, pw_tiled)
    jax.block_until_ready(y_tiled)
    assert jnp.allclose(y_tiled, y_ref, atol=1e-5, rtol=1e-5), "tiled mismatch vs reference"

    print("KERNEL_OK")
</pallas_src>

<mosaic_0001>
module attributes {stable_mosaic.version = 11 : i64} {
  func.func @_pi_resident_kernel(%arg0: i32, %arg1: memref<8x128xbf16, #tpu.memory_space<vmem>>, %arg2: memref<128x128xbf16, #tpu.memory_space<vmem>>, %arg3: memref<8x128xf32, #tpu.memory_space<vmem>>) attributes {dimension_semantics = [#tpu.dimension_semantics<parallel>], iteration_bounds = array<i64: 1>, scalar_prefetch = 0 : i64, scratch_operands = 0 : i64, tpu.core_type = #tpu.core_type<tc>, window_params = [{transform_indices = @transform_0, window_bounds = array<i64: 8, 128>}, {pipeline_mode = #tpu.pipeline_mode<synchronous>, transform_indices = @transform_1, window_bounds = array<i64: 128, 128>}, {transform_indices = @transform_2, window_bounds = array<i64: 8, 128>}]} {
    %c0 = arith.constant 0 : index
    %c0_0 = arith.constant 0 : index
    %0 = vector.load %arg2[%c0, %c0_0] : memref<128x128xbf16, #tpu.memory_space<vmem>>, vector<128x128xbf16>
    %1 = math.absf %0 : vector<128x128xbf16>
    %c0_1 = arith.constant 0 : index
    %c0_2 = arith.constant 0 : index
    %2 = vector.load %arg1[%c0_1, %c0_2] : memref<8x128xbf16, #tpu.memory_space<vmem>>, vector<8x128xbf16>
    %cst = arith.constant dense<0.000000e+00> : vector<8x128xf32>
    %3 = tpu.matmul %2, %1, %cst {dimension_numbers = #tpu.dot_dimension_numbers<[1], [0], [0], [1], [0, 0, 1, 1], [], []>} : vector<8x128xbf16>, vector<128x128xbf16>, vector<8x128xf32> -> vector<8x128xf32>
    %c0_3 = arith.constant 0 : index
    %c0_4 = arith.constant 0 : index
    %4 = vector.load %arg3[%c0_3, %c0_4] : memref<8x128xf32, #tpu.memory_space<vmem>>, vector<8x128xf32>
    tpu.vector_store %arg3[%c0_3, %c0_4], %3 {strides = array<i32>} : memref<8x128xf32, #tpu.memory_space<vmem>>, vector<8x128xf32>,
    return
  }
  func.func @transform_0(%arg0: i32) -> (i32, i32) {
    %c0_i32 = arith.constant 0 : i32
    %c0_i32_0 = arith.constant 0 : i32
    return %arg0, %c0_i32 : i32, i32
  }
  func.func @transform_1(%arg0: i32) -> (i32, i32) {
    %c0_i32 = arith.constant 0 : i32
    %c0_i32_0 = arith.constant 0 : i32
    %c0_i32_1 = arith.constant 0 : i32
    return %c0_i32, %c0_i32_0 : i32, i32
  }
  func.func @transform_2(%arg0: i32) -> (i32, i32) {
    %c0_i32 = arith.constant 0 : i32
    %c0_i32_0 = arith.constant 0 : i32
    return %arg0, %c0_i32 : i32, i32
  }
}

</mosaic_0001>

<llo_original>
// kernel: tpu_custom_call.1
$region0: #{tpu_custom_call.1}
  #allocation0 [shape = 'u32[]', space=smem, size = 0x4, offset = 0x4, fixed_abs, tag = 'smem constant byte address 0x4 - core index']
  #allocation1 [shape = 'u32[144,128]{1,0:T(1,128)}', space=vmem, size = 0x12000, scoped, tag = 'internal scratch']
  %s0 = inlined_call_operand.hbm [shape: bf16[8,128], index: 0, kind: input, shape index: {}]
  %s1 = inlined_call_operand.hbm [shape: bf16[128,128], index: 1, kind: input, shape index: {}]
  %s2 = inlined_call_operand.hbm [shape: f32[8,128], index: 2, kind: output, shape index: {}]
  %s3 = sld [smem:[#allocation0]]
  $region26: #{tpu_custom_call.1} parent=0
    _
  %s5 = ssub.s32 1, %s3
  %s6 = scalar_select 0, %s5, %s3
  $region1: #{tpu_custom_call.1} parent=0
    #allocation2 [shape = 'u8[2048]{0}', space=vmem, size = 0x800, scoped, tag = 'input window, operand 0, single buffered']
    #allocation3 [shape = 's32[1]{0}', space=sflag, size = 0x4, scoped, tag = 'scoped memory for tpu_custom_call.1']
    #allocation4 [shape = 's32[1]{0}', space=sflag, size = 0x4, scoped, tag = 'scoped memory for tpu_custom_call.1']
    #allocation5 [shape = 'u8[32768]{0}', space=vmem, size = 0x8000, scoped, tag = 'input window, operand 1, single buffered']
    #allocation6 [shape = 's32[1]{0}', space=sflag, size = 0x4, scoped, tag = 'scoped memory for tpu_custom_call.1']
    #allocation7 [shape = 'u8[4096]{0}', space=vmem, size = 0x1000, scoped, tag = 'output window, operand 0, single buffered']
    %7 = vsyncpa [#allocation3], 0
    %8 = vsyncpa [#allocation6], 0
    %9 = vsyncpa [#allocation4], 0
    // Predicated region
    $region2: #{tpu_custom_call.1} parent=1 // pred_check
      _
    $region3: #{tpu_custom_call.1} parent=1 // pred_check_branch
      %11 = sbr.rel (0) target = $region5
    $region4: #{tpu_custom_call.1} parent=1 // pred_region
      %s13 = ssub.s32 64, 64
      %14 = vsyncadd [#allocation3], %s13
      %s16 = sshll.u32 [#allocation2], 4
      %s17 = int_to_ptr.vmem [resolvable:$true] %s16
      %19 = dma.hbm_to_vmem [thread:$0]  %s0, 64, %s17, [#allocation3]
    $region5: #{tpu_custom_call.1} parent=1 // pred_fallthru
      _
    // Predicated region
    $region6: #{tpu_custom_call.1} parent=1 // pred_check
      _
    $region7: #{tpu_custom_call.1} parent=1 // pred_check_branch
      %21 = sbr.rel (0) target = $region9
    $region8: #{tpu_custom_call.1} parent=1 // pred_region
      %s23 = ssub.s32 1024, 1024
      %24 = vsyncadd [#allocation6], %s23
      %s25 = sshll.u32 [#allocation5], 4
      %s26 = int_to_ptr.vmem [resolvable:$true] %s25
      %31 = dma.hbm_to_vmem [thread:$0]  %s1, 1024, %s26, [#allocation6], 64, 64, 4
    $region9: #{tpu_custom_call.1} parent=1 // pred_fallthru
      _
    // Predicated region
    $region10: #{tpu_custom_call.1} parent=1 // pred_check
      _
    $region11: #{tpu_custom_call.1} parent=1 // pred_check_branch
      %33 = sbr.rel (0) target = $region13
    $region12: #{tpu_custom_call.1} parent=1 // pred_region
      %34 = dma.done [#allocation3], 64
    $region13: #{tpu_custom_call.1} parent=1 // pred_fallthru
      _
    // Predicated region
    $region14: #{tpu_custom_call.1} parent=1 // pred_check
      _
    $region15: #{tpu_custom_call.1} parent=1 // pred_check_branch
      %36 = sbr.rel (0) target = $region17
    $region16: #{tpu_custom_call.1} parent=1 // pred_region
      %37 = dma.done [#allocation6], 1024
    $region17: #{tpu_custom_call.1} parent=1 // pred_fallthru
      _
    %v39 = vld [vmem:[#allocation5] sm:$0xf]
    %v40 = vld [vmem:[#allocation5 + $0x4] sm:$0xf]
    %v41 = vld [vmem:[#allocation5 + $0x8] sm:$0xf]
    %v42 = vld [vmem:[#allocation5 + $0xc] sm:$0xf]
    %v43 = vld [vmem:[#allocation5 + $0x10] sm:$0xf]
    %v44 = vld [vmem:[#allocation5 + $0x14] sm:$0xf]
    %v45 = vld [vmem:[#allocation5 + $0x18] sm:$0xf]
    %v46 = vld [vmem:[#allocation5 + $0x1c] sm:$0xf]
    %v47 = vld [vmem:[#allocation5 + $0x20] sm:$0xf]
    %v48 = vld [vmem:[#allocation5 + $0x24] sm:$0xf]
    %v49 = vld [vmem:[#allocation5 + $0x28] sm:$0xf]
    %v50 = vld [vmem:[#allocation5 + $0x2c] sm:$0xf]
    %v51 = vld [vmem:[#allocation5 + $0x30] sm:$0xf]
    %v52 = vld [vmem:[#allocation5 + $0x34] sm:$0xf]
    %v53 = vld [vmem:[#allocation5 + $0x38] sm:$0xf]
    %v54 = vld [vmem:[#allocation5 + $0x3c] sm:$0xf]
    %v55 = vand.u32 2147450879, %v39
    %v56 = vand.u32 2147450879, %v40
    %v57 = vand.u32 2147450879, %v41
    %v58 = vand.u32 2147450879, %v42
    %v59 = vand.u32 2147450879, %v43
    %v60 = vand.u32 2147450879, %v44
    %v61 = vand.u32 2147450879, %v45
    %v62 = vand.u32 2147450879, %v46
    %v63 = vand.u32 2147450879, %v47
    %v64 = vand.u32 2147450879, %v48
    %v65 = vand.u32 2147450879, %v49
    %v66 = vand.u32 2147450879, %v50
    %v67 = vand.u32 2147450879, %v51
    %v68 = vand.u32 2147450879, %v52
    %v69 = vand.u32 2147450879, %v53
    %v70 = vand.u32 2147450879, %v54
    %v71 = vld [vmem:[#allocation2] sm:$0xf]
    %v88 = vunpack.c.l.b16 %v55
    %v89 = vunpack.c.l.b16 %v56
    %v90 = vunpack.c.l.b16 %v57
    %v91 = vunpack.c.l.b16 %v58
    %v92 = vunpack.c.l.b16 %v59
    %v93 = vunpack.c.l.b16 %v60
    %v94 = vunpack.c.l.b16 %v61
    %v95 = vunpack.c.l.b16 %v62
    %v96 = vunpack.c.l.b16 %v63
    %v97 = vunpack.c.l.b16 %v64
    %v98 = vunpack.c.l.b16 %v65
    %v99 = vunpack.c.l.b16 %v66
    %v100 = vunpack.c.l.b16 %v67
    %v101 = vunpack.c.l.b16 %v68
    %v102 = vunpack.c.l.b16 %v69
    %v103 = vunpack.c.l.b16 %v70
    %v104 = vpack.c.b16 %v89, %v88
    %v105 = vpack.c.b16 %v91, %v90
    %v106 = vpack.c.b16 %v93, %v92
    %v107 = vpack.c.b16 %v95, %v94
    %v108 = vpack.c.b16 %v97, %v96
    %v109 = vpack.c.b16 %v99, %v98
    %v110 = vpack.c.b16 %v101, %v100
    %v111 = vpack.c.b16 %v103, %v102
    %120 = vmatprep.subr.bf16.mxu0 0
    %121 = vmatpush1.bf16.msra.mxu0 %v104
    %122 = vmatprep.subr.bf16.mxu0 0
    %123 = vmatpush1.bf16.msra.mxu0 %v105
    %124 = vmatprep.subr.bf16.mxu0 0
    %125 = vmatpush1.bf16.msra.mxu0 %v106
    %126 = vmatprep.subr.bf16.mxu0 0
    %127 = vmatpush1.bf16.msra.mxu0 %v107
    %128 = vmatprep.subr.bf16.mxu0 0
    %129 = vmatpush1.bf16.msra.mxu0 %v108
    %130 = vmatprep.subr.bf16.mxu0 0
    %131 = vmatpush1.bf16.msra.mxu0 %v109
    %132 = vmatprep.subr.bf16.mxu0 0
    %133 = vmatpush1.bf16.msra.mxu0 %v110
    %134 = vmatprep.subr.bf16.mxu0 0
    %135 = vmatpush1.bf16.msra.mxu0 %v111
    %136 = vmatprep.subr.bf16.mxu0 0
    %137 = vmatpush1.bf16.msra.mxu0 0
    %138 = vmatprep.subr.bf16.mxu0 0
    %139 = vmatpush1.bf16.msra.mxu0 0
    %140 = vmatprep.subr.bf16.mxu0 0
    %141 = vmatpush1.bf16.msra.mxu0 0
    %142 = vmatprep.subr.bf16.mxu0 0
    %143 = vmatpush1.bf16.msra.mxu0 0
    %144 = vmatprep.subr.bf16.mxu0 0
    %145 = vmatpush1.bf16.msra.mxu0 0
    %146 = vmatprep.subr.bf16.mxu0 0
    %147 = vmatpush1.bf16.msra.mxu0 0
    %148 = vmatprep.subr.bf16.mxu0 0
    %149 = vmatpush1.bf16.msra.mxu0 0
    %150 = vmatprep.subr.bf16.mxu0 0
    %151 = vmatpush1.bf16.msra.mxu0 0
    %152 = vmatprep.mubr.bf16.mxu0 0
    %153 = vmatmul.mubr.bf16.gmra.mrb[0].mxu0 %v71
    %v154 = vpop.f32.mrb[0].mxu0
    %v155 = vadd.f32 0.0, %v154
    %v156 = vpop.f32.mrb[0].mxu0
    %v157 = vpop.f32.mrb[0].mxu0
    %v158 = vpop.f32.mrb[0].mxu0
    %159 = vdwg.mxu0
    %160 = vst [vmem:[#allocation7] sm:$0xff] %v155
    // Predicated region
    $region18: #{tpu_custom_call.1} parent=1 // pred_check
      _
    $region19: #{tpu_custom_call.1} parent=1 // pred_check_branch
      %162 = sbr.rel (0) target = $region21
    $region20: #{tpu_custom_call.1} parent=1 // pred_region
      %s164 = ssub.s32 128, 128
      %165 = vsyncadd [#allocation4], %s164
      %s167 = sshll.u32 [#allocation7], 4
      %s168 = int_to_ptr.vmem [resolvable:$true] %s167
      %170 = dma.vmem_to_hbm [thread:$0]  %s168, 128, %s2, [#allocation4]
    $region21: #{tpu_custom_call.1} parent=1 // pred_fallthru
      _
    // Predicated region
    $region22: #{tpu_custom_call.1} parent=1 // pred_check
      _
    $region23: #{tpu_custom_call.1} parent=1 // pred_check_branch
      %172 = sbr.rel (0) target = $region25
    $region24: #{tpu_custom_call.1} parent=1 // pred_region
      %173 = dma.done [#allocation4], 128
    $region25: #{tpu_custom_call.1} parent=1 // pred_fallthru
      _
    %174 = vsyncpa [#allocation3], 1
    %175 = vsyncpa [#allocation6], 1
    %176 = vsyncpa [#allocation4], 1

</llo_original>
